<compile_context>
chip_gen: v5e
topology: v5e:2x2
jax: 0.10.0
libtpu: 0.0.40
codegen_flags: <defaults>
</compile_context>

<pallas_src>
import functools

import jax
import jax.numpy as jnp
from jax.experimental import pallas as pl
from jax.experimental.pallas import tpu as pltpu


def _round_up(x, m):
    return (x + m - 1) // m * m


def _cdiv(a, b):
    return (a + b - 1) // b


def _pad_cast_2d(a, rows, cols, dtype):
    """Cast and zero-pad a 2-D array to (rows, cols); skips padding when already aligned."""
    a = a.astype(dtype)
    r, c = a.shape
    if r == rows and c == cols:
        return a
    return jnp.zeros((rows, cols), dtype).at[:r, :c].set(a)


def _vmem_capacity_bytes():
    """Per-core VMEM capacity; conservative 64 MiB fallback (v7x size, safe everywhere)."""
    try:
        return int(pltpu.get_tpu_info().vmem_capacity_bytes)
    except Exception:
        return 64 * 1024 * 1024


# ---------------------------------------------------------------------------
# Kernels
# ---------------------------------------------------------------------------

def mlp_resident_kernel(x_ref, w1_ref, b1_ref, w2_ref, b2_ref, o_ref):
    # hidden = relu(x @ W1 + b1): bf16 MXU inputs, f32 accumulation, f32 bias+ReLU (VPU).
    h = jnp.dot(x_ref[...], w1_ref[...], preferred_element_type=jnp.float32)
    h = jnp.maximum(h + b1_ref[...], 0.0).astype(w2_ref.dtype)
    # out = hidden @ W2 + b2
    o = jnp.dot(h, w2_ref[...], preferred_element_type=jnp.float32)
    o_ref[...] = (o + b2_ref[...]).astype(o_ref.dtype)


def mlp_stream_kernel(x_ref, w1_ref, b1_ref, w2_ref, b2_ref, o_ref, acc_ref):
    # Hidden-dim streaming: accumulate relu(x @ W1[:, c] + b1[c]) @ W2[c, :] over chunks c.
    j = pl.program_id(1)

    @pl.when(j == 0)
    def _():
        acc_ref[...] = jnp.zeros_like(acc_ref)

    h = jnp.dot(x_ref[...], w1_ref[...], preferred_element_type=jnp.float32)
    h = jnp.maximum(h + b1_ref[...], 0.0).astype(w2_ref.dtype)
    acc_ref[...] += jnp.dot(h, w2_ref[...], preferred_element_type=jnp.float32)

    @pl.when(j == pl.num_programs(1) - 1)
    def _():
        o_ref[...] = (acc_ref[...] + b2_ref[...]).astype(o_ref.dtype)


# ---------------------------------------------------------------------------
# Wrappers
# ---------------------------------------------------------------------------

def prepare_params(w1, b1, w2, b2, compute_dtype=jnp.bfloat16):
    """Pad feature dims to multiples of 128 and cast weights once (hoisted out of the
    per-call path). Returns padded params plus the true out_dim for un-padding."""
    in_dim, hid = w1.shape
    out_dim = w2.shape[1]
    K, H, N = _round_up(in_dim, 128), _round_up(hid, 128), _round_up(out_dim, 128)
    w1p = _pad_cast_2d(w1, K, H, compute_dtype)
    b1p = _pad_cast_2d(b1.reshape(1, -1), 1, H, jnp.float32)
    w2p = _pad_cast_2d(w2, H, N, compute_dtype)
    b2p = _pad_cast_2d(b2.reshape(1, -1), 1, N, jnp.float32)
    return (w1p, b1p, w2p, b2p), out_dim


@functools.partial(jax.jit, static_argnames=("out_dim", "block_m", "force_stream"))
def mlp_forward_padded(x, w1p, b1p, w2p, b2p, *, out_dim, block_m=512, force_stream=False):
    """x: [B, in_dim] (any float dtype); padded/cast params from prepare_params."""
    B = x.shape[0]
    K, H = w1p.shape
    N = w2p.shape[1]
    cdt = w1p.dtype
    out_dtype = x.dtype
    cbytes = jnp.dtype(cdt).itemsize
    obytes = jnp.dtype(out_dtype).itemsize

    # Divisor-aware batch tile: minimal padding, multiple of 16 (bf16 sublane packing).
    n_tiles = max(1, _cdiv(B, block_m))
    tm = _round_up(_cdiv(B, n_tiles), 16)
    # v7x: with a single batch tile one TensorCore idles; split one oversized tile in two.
    if _cdiv(B, tm) == 1 and tm >= 32:
        tm = _round_up(_cdiv(tm, 2), 16)
    Bp = _round_up(B, tm)
    n_tiles = Bp // tm

    xp = _pad_cast_2d(x, Bp, K, cdt)

    budget = int(0.85 * _vmem_capacity_bytes())   # generation-aware cap (64 MiB on v7x)

    # VMEM accounting: pipelined x/out are double-buffered, resident weights single-buffered;
    # include the f32 hidden, its bf16 repack, and the f32 output temp.
    io_bytes = 2 * tm * K * cbytes + 2 * tm * N * obytes
    resident_bytes = (io_bytes
                      + (K * H + H * N) * cbytes + (H + N) * 4
                      + tm * H * (4 + cbytes) + tm * N * 4)

    flops = 2 * Bp * (K * H + H * N)
    bytes_accessed = (Bp * K * cbytes + (K * H + H * N) * cbytes
                      + (H + N) * 4 + Bp * N * obytes)
    cost = pl.CostEstimate(flops=flops, transcendentals=0, bytes_accessed=bytes_accessed)

    if resident_bytes <= budget and not force_stream:
        # Weight-stationary path: resident, single-buffered weights; batch tiles pipeline.
        vmem_limit = min(max(int(1.3 * resident_bytes), 32 * 1024 * 1024), budget)
        return pl.pallas_call(
            mlp_resident_kernel,
            out_shape=jax.ShapeDtypeStruct((Bp, N), out_dtype),
            grid=(n_tiles,),
            in_specs=[
                pl.BlockSpec((tm, K), lambda i: (i, 0)),
                pl.BlockSpec((K, H), lambda i: (0, 0), pipeline_mode=pl.Buffered(1)),
                pl.BlockSpec((1, H), lambda i: (0, 0), pipeline_mode=pl.Buffered(1)),
                pl.BlockSpec((H, N), lambda i: (0, 0), pipeline_mode=pl.Buffered(1)),
                pl.BlockSpec((1, N), lambda i: (0, 0), pipeline_mode=pl.Buffered(1)),
            ],
            out_specs=pl.BlockSpec((tm, N), lambda i: (i, 0)),
            compiler_params=pltpu.CompilerParams(
                dimension_semantics=("parallel",),
                vmem_limit_bytes=vmem_limit),
            cost_estimate=cost,
        )(xp, w1p, b1p, w2p, b2p)[:B, :out_dim]

    # Weight-streaming fallback: second grid axis over the hidden dim (arbitrary / reduction).
    def stream_bytes(th_):
        return (io_bytes + 2 * (K * th_ + th_ * N) * cbytes + 2 * (th_ + N) * 4
                + tm * th_ * (4 + cbytes) + tm * N * 4)

    th = 128                                     # H is a multiple of 128, so 128 always divides
    for cand in (512, 256):
        if H % cand == 0 and stream_bytes(cand) <= budget:
            th = cand
            break
    th = min(th, H)

    vmem_limit = min(max(int(1.3 * stream_bytes(th)), 32 * 1024 * 1024), budget)
    return pl.pallas_call(
        mlp_stream_kernel,
        out_shape=jax.ShapeDtypeStruct((Bp, N), out_dtype),
        grid=(n_tiles, H // th),
        in_specs=[
            pl.BlockSpec((tm, K), lambda i, j: (i, 0)),       # constant over j: no re-DMA
            pl.BlockSpec((K, th), lambda i, j: (0, j)),       # W1 hidden-column chunk
            pl.BlockSpec((1, th), lambda i, j: (0, j)),       # b1 chunk
            pl.BlockSpec((th, N), lambda i, j: (j, 0)),       # W2 hidden-row chunk
            pl.BlockSpec((1, N), lambda i, j: (0, 0), pipeline_mode=pl.Buffered(1)),
        ],
        out_specs=pl.BlockSpec((tm, N), lambda i, j: (i, 0)),
        scratch_shapes=[pltpu.VMEM((tm, N), jnp.float32)],
        compiler_params=pltpu.CompilerParams(
            dimension_semantics=("parallel", "arbitrary"),
            vmem_limit_bytes=vmem_limit),
        cost_estimate=cost,
    )(xp, w1p, b1p, w2p, b2p)[:B, :out_dim]


def mlp_forward(x, w1, b1, w2, b2, *, block_m=512, compute_dtype=jnp.bfloat16,
                force_stream=False):
    """One-shot convenience wrapper (prep + forward). For repeated calls, call
    prepare_params once and reuse its output with mlp_forward_padded."""
    (w1p, b1p, w2p, b2p), out_dim = prepare_params(w1, b1, w2, b2, compute_dtype)
    return mlp_forward_padded(x, w1p, b1p, w2p, b2p, out_dim=out_dim,
                              block_m=block_m, force_stream=force_stream)


# ---------------------------------------------------------------------------
# Reference + test
# ---------------------------------------------------------------------------

def init_params(key, in_dim, out_dim, dtype=jnp.float32):
    # MLP spec: Linear(in_dim, out_dim) -> ReLU -> Linear(out_dim, out_dim); hid == out_dim.
    hid = out_dim
    k1, k2, k3, k4 = jax.random.split(key, 4)
    lim1 = 1.0 / jnp.sqrt(in_dim)
    lim2 = 1.0 / jnp.sqrt(hid)
    w1 = jax.random.uniform(k1, (in_dim, hid), dtype, -lim1, lim1)
    b1 = jax.random.uniform(k2, (1, hid), dtype, -lim1, lim1)
    w2 = jax.random.uniform(k3, (hid, out_dim), dtype, -lim2, lim2)
    b2 = jax.random.uniform(k4, (1, out_dim), dtype, -lim2, lim2)
    return w1, b1, w2, b2


def ref_forward(x, w1, b1, w2, b2, compute_dtype=jnp.bfloat16):
    # Plain-JAX reference emulating the kernel's bf16-input / f32-accumulate math.
    c = lambda a: a.astype(compute_dtype).astype(jnp.float32)
    h = jnp.maximum(c(x) @ c(w1) + b1.astype(jnp.float32), 0.0)
    o = c(h) @ c(w2) + b2.astype(jnp.float32)
    return o.astype(x.dtype)


if __name__ == "__main__":
    key = jax.random.PRNGKey(0)
    kx, kp = jax.random.split(key)

    batch, in_dim, out_dim = 8, 32, 32
    x = jax.random.normal(kx, (batch, in_dim), jnp.float32)
    w1, b1, w2, b2 = init_params(kp, in_dim, out_dim)

    # Weight prep hoisted out of the per-call path.
    params, odim = prepare_params(w1, b1, w2, b2)

    # Resident (weight-stationary) path.
    out = mlp_forward_padded(x, *params, out_dim=odim)
    out = jax.block_until_ready(out)
    assert out.shape == (batch, out_dim)

    # Streaming (hidden-chunked accumulator) path, exercised explicitly.
    out_stream = mlp_forward_padded(x, *params, out_dim=odim, force_stream=True)
    out_stream = jax.block_until_ready(out_stream)

    ref_bf16 = ref_forward(x, w1, b1, w2, b2)
    ref_f32 = jnp.maximum(x @ w1 + b1, 0.0) @ w2 + b2
    assert jnp.allclose(out, ref_bf16, atol=1e-3, rtol=1e-3)
    assert jnp.allclose(out_stream, ref_bf16, atol=1e-3, rtol=1e-3)
    assert jnp.allclose(out, ref_f32, atol=5e-2, rtol=5e-2)

    print("KERNEL_OK")
</pallas_src>

<mosaic_0001>
module attributes {stable_mosaic.version = 11 : i64} {
  func.func @mlp_resident_kernel(%arg0: i32, %arg1: memref<16x128xbf16, #tpu.memory_space<vmem>>, %arg2: memref<128x128xbf16, #tpu.memory_space<vmem>>, %arg3: memref<1x128xf32, #tpu.memory_space<vmem>>, %arg4: memref<128x128xbf16, #tpu.memory_space<vmem>>, %arg5: memref<1x128xf32, #tpu.memory_space<vmem>>, %arg6: memref<16x128xf32, #tpu.memory_space<vmem>>) attributes {dimension_semantics = [#tpu.dimension_semantics<parallel>], iteration_bounds = array<i64: 1>, scalar_prefetch = 0 : i64, scratch_operands = 0 : i64, tpu.core_type = #tpu.core_type<tc>, window_params = [{transform_indices = @transform_0, window_bounds = array<i64: 16, 128>}, {pipeline_mode = #tpu.pipeline_mode<synchronous>, transform_indices = @transform_1, window_bounds = array<i64: 128, 128>}, {pipeline_mode = #tpu.pipeline_mode<synchronous>, transform_indices = @transform_2, window_bounds = array<i64: 1, 128>}, {pipeline_mode = #tpu.pipeline_mode<synchronous>, transform_indices = @transform_3, window_bounds = array<i64: 128, 128>}, {pipeline_mode = #tpu.pipeline_mode<synchronous>, transform_indices = @transform_4, window_bounds = array<i64: 1, 128>}, {transform_indices = @transform_5, window_bounds = array<i64: 16, 128>}]} {
    %c0 = arith.constant 0 : index
    %c0_0 = arith.constant 0 : index
    %0 = vector.load %arg1[%c0, %c0_0] : memref<16x128xbf16, #tpu.memory_space<vmem>>, vector<16x128xbf16>
    %c0_1 = arith.constant 0 : index
    %c0_2 = arith.constant 0 : index
    %1 = vector.load %arg2[%c0_1, %c0_2] : memref<128x128xbf16, #tpu.memory_space<vmem>>, vector<128x128xbf16>
    %cst = arith.constant dense<0.000000e+00> : vector<16x128xf32>
    %2 = tpu.matmul %0, %1, %cst {dimension_numbers = #tpu.dot_dimension_numbers<[1], [0], [0], [1], [0, 0, 1, 1], [], []>} : vector<16x128xbf16>, vector<128x128xbf16>, vector<16x128xf32> -> vector<16x128xf32>
    %c0_3 = arith.constant 0 : index
    %c0_4 = arith.constant 0 : index
    %3 = vector.load %arg3[%c0_3, %c0_4] : memref<1x128xf32, #tpu.memory_space<vmem>>, vector<1x128xf32>
    %4 = vector.broadcast %3 : vector<1x128xf32> to vector<16x128xf32>
    %5 = arith.addf %2, %4 : vector<16x128xf32>
    %cst_5 = arith.constant 0.000000e+00 : f32
    %6 = vector.broadcast %cst_5 : f32 to vector<16x128xf32>
    %7 = arith.maximumf %5, %6 : vector<16x128xf32>
    %8 = arith.truncf %7 : vector<16x128xf32> to vector<16x128xbf16>
    %c0_6 = arith.constant 0 : index
    %c0_7 = arith.constant 0 : index
    %9 = vector.load %arg4[%c0_6, %c0_7] : memref<128x128xbf16, #tpu.memory_space<vmem>>, vector<128x128xbf16>
    %cst_8 = arith.constant dense<0.000000e+00> : vector<16x128xf32>
    %10 = tpu.matmul %8, %9, %cst_8 {dimension_numbers = #tpu.dot_dimension_numbers<[1], [0], [0], [1], [0, 0, 1, 1], [], []>} : vector<16x128xbf16>, vector<128x128xbf16>, vector<16x128xf32> -> vector<16x128xf32>
    %c0_9 = arith.constant 0 : index
    %c0_10 = arith.constant 0 : index
    %11 = vector.load %arg5[%c0_9, %c0_10] : memref<1x128xf32, #tpu.memory_space<vmem>>, vector<1x128xf32>
    %12 = vector.broadcast %11 : vector<1x128xf32> to vector<16x128xf32>
    %13 = arith.addf %10, %12 : vector<16x128xf32>
    %c0_11 = arith.constant 0 : index
    %c0_12 = arith.constant 0 : index
    %14 = vector.load %arg6[%c0_11, %c0_12] : memref<16x128xf32, #tpu.memory_space<vmem>>, vector<16x128xf32>
    tpu.vector_store %arg6[%c0_11, %c0_12], %13 {strides = array<i32>} : memref<16x128xf32, #tpu.memory_space<vmem>>, vector<16x128xf32>,
    return
  }
  func.func @transform_0(%arg0: i32) -> (i32, i32) {
    %c0_i32 = arith.constant 0 : i32
    %c0_i32_0 = arith.constant 0 : i32
    return %arg0, %c0_i32 : i32, i32
  }
  func.func @transform_1(%arg0: i32) -> (i32, i32) {
    %c0_i32 = arith.constant 0 : i32
    %c0_i32_0 = arith.constant 0 : i32
    %c0_i32_1 = arith.constant 0 : i32
    return %c0_i32, %c0_i32_0 : i32, i32
  }
  func.func @transform_2(%arg0: i32) -> (i32, i32) {
    %c0_i32 = arith.constant 0 : i32
    %c0_i32_0 = arith.constant 0 : i32
    %c0_i32_1 = arith.constant 0 : i32
    return %c0_i32, %c0_i32_0 : i32, i32
  }
  func.func @transform_3(%arg0: i32) -> (i32, i32) {
    %c0_i32 = arith.constant 0 : i32
    %c0_i32_0 = arith.constant 0 : i32
    %c0_i32_1 = arith.constant 0 : i32
    return %c0_i32, %c0_i32_0 : i32, i32
  }
  func.func @transform_4(%arg0: i32) -> (i32, i32) {
    %c0_i32 = arith.constant 0 : i32
    %c0_i32_0 = arith.constant 0 : i32
    %c0_i32_1 = arith.constant 0 : i32
    return %c0_i32, %c0_i32_0 : i32, i32
  }
  func.func @transform_5(%arg0: i32) -> (i32, i32) {
    %c0_i32 = arith.constant 0 : i32
    %c0_i32_0 = arith.constant 0 : i32
    return %arg0, %c0_i32 : i32, i32
  }
}

</mosaic_0001>

<llo_original>
// kernel: mlp_forward_padded.1
$region0: #{mlp_forward_padded.1}
  #allocation0 [shape = 'u32[]', space=smem, size = 0x4, offset = 0x4, fixed_abs, tag = 'smem constant byte address 0x4 - core index']
  #allocation1 [shape = 'u32[72,128]{1,0:T(1,128)}', space=vmem, size = 0x9000, scoped, tag = 'internal scratch']
  %s0 = inlined_call_operand.vmem [shape: bf16[16,128], index: 0, kind: input, shape index: {}]
  %s1 = inlined_call_operand.hbm [shape: bf16[128,128], index: 1, kind: input, shape index: {}]
  %s2 = inlined_call_operand.vmem [shape: f32[1,128], index: 2, kind: input, shape index: {}]
  %s3 = inlined_call_operand.hbm [shape: bf16[128,128], index: 3, kind: input, shape index: {}]
  %s4 = inlined_call_operand.vmem [shape: f32[1,128], index: 4, kind: input, shape index: {}]
  %s5 = inlined_call_operand.vmem [shape: f32[16,128], index: 5, kind: output, shape index: {}]
  %s6 = sld [smem:[#allocation0]]
  $region38: #{mlp_forward_padded.1} parent=0
    _
  %s8 = ssub.s32 1, %s6
  %s9 = scalar_select 0, %s8, %s6
  $region1: #{mlp_forward_padded.1} parent=0
    #allocation2 [shape = 'u8[32768]{0}', space=vmem, size = 0x8000, scoped, tag = 'input window, operand 1, single buffered']
    #allocation3 [shape = 's32[1]{0}', space=sflag, size = 0x4, scoped, tag = 'scoped memory for mlp_forward_padded.1']
    #allocation4 [shape = 'u8[32768]{0}', space=vmem, size = 0x8000, scoped, tag = 'input window, operand 3, single buffered']
    #allocation5 [shape = 's32[1]{0}', space=sflag, size = 0x4, scoped, tag = 'scoped memory for mlp_forward_padded.1']
    %10 = vsyncpa [#allocation3], 0
    %11 = vsyncpa [#allocation5], 0
    // Predicated region
    $region2: #{mlp_forward_padded.1} parent=1 // pred_check
      _
    $region3: #{mlp_forward_padded.1} parent=1 // pred_check_branch
      %13 = sbr.rel (0) target = $region5
    $region4: #{mlp_forward_padded.1} parent=1 // pred_region
      _
    $region5: #{mlp_forward_padded.1} parent=1 // pred_fallthru
      _
    // Predicated region
    $region6: #{mlp_forward_padded.1} parent=1 // pred_check
      _
    $region7: #{mlp_forward_padded.1} parent=1 // pred_check_branch
      %15 = sbr.rel (0) target = $region9
    $region8: #{mlp_forward_padded.1} parent=1 // pred_region
      %17 = vsyncadd [#allocation3], 0
      %s18 = sshll.u32 %s1, 4
      %s19 = int_to_ptr.hbm [resolvable:$true] %s18
      %s20 = sshll.u32 [#allocation2], 4
      %s21 = int_to_ptr.vmem [resolvable:$true] %s20
      %26 = dma.hbm_to_vmem [thread:$0]  %s19, 1024, %s21, [#allocation3], 64, 64, 4
    $region9: #{mlp_forward_padded.1} parent=1 // pred_fallthru
      _
    // Predicated region
    $region10: #{mlp_forward_padded.1} parent=1 // pred_check
      _
    $region11: #{mlp_forward_padded.1} parent=1 // pred_check_branch
      %28 = sbr.rel (0) target = $region13
    $region12: #{mlp_forward_padded.1} parent=1 // pred_region
      _
    $region13: #{mlp_forward_padded.1} parent=1 // pred_fallthru
      _
    // Predicated region
    $region14: #{mlp_forward_padded.1} parent=1 // pred_check
      _
    $region15: #{mlp_forward_padded.1} parent=1 // pred_check_branch
      %30 = sbr.rel (0) target = $region17
    $region16: #{mlp_forward_padded.1} parent=1 // pred_region
      %32 = vsyncadd [#allocation5], 0
      %s33 = sshll.u32 %s3, 4
      %s34 = int_to_ptr.hbm [resolvable:$true] %s33
      %s35 = sshll.u32 [#allocation4], 4
      %s36 = int_to_ptr.vmem [resolvable:$true] %s35
      %41 = dma.hbm_to_vmem [thread:$0]  %s34, 1024, %s36, [#allocation5], 64, 64, 4
    $region17: #{mlp_forward_padded.1} parent=1 // pred_fallthru
      _
    // Predicated region
    $region18: #{mlp_forward_padded.1} parent=1 // pred_check
      _
    $region19: #{mlp_forward_padded.1} parent=1 // pred_check_branch
      %43 = sbr.rel (0) target = $region21
    $region20: #{mlp_forward_padded.1} parent=1 // pred_region
      _
    $region21: #{mlp_forward_padded.1} parent=1 // pred_fallthru
      _
    // Predicated region
    $region22: #{mlp_forward_padded.1} parent=1 // pred_check
      _
    $region23: #{mlp_forward_padded.1} parent=1 // pred_check_branch
      %45 = sbr.rel (0) target = $region25
    $region24: #{mlp_forward_padded.1} parent=1 // pred_region
      %47 = dma.done [#allocation3], 1024
    $region25: #{mlp_forward_padded.1} parent=1 // pred_fallthru
      _
    // Predicated region
    $region26: #{mlp_forward_padded.1} parent=1 // pred_check
      _
    $region27: #{mlp_forward_padded.1} parent=1 // pred_check_branch
      %49 = sbr.rel (0) target = $region29
    $region28: #{mlp_forward_padded.1} parent=1 // pred_region
      %51 = dma.done [#allocation5], 1024
    $region29: #{mlp_forward_padded.1} parent=1 // pred_fallthru
      _
    %v52 = vld [vmem:[%s0] sm:$0xf]
    %v53 = vld [vmem:[%s0 + $0x4] sm:$0xf]
    %v54 = vld [vmem:[#allocation2] sm:$0xf]
    %v55 = vld [vmem:[#allocation2 + $0x4] sm:$0xf]
    %v56 = vld [vmem:[#allocation2 + $0x8] sm:$0xf]
    %v57 = vld [vmem:[#allocation2 + $0xc] sm:$0xf]
    %v58 = vld [vmem:[#allocation2 + $0x10] sm:$0xf]
    %v59 = vld [vmem:[#allocation2 + $0x14] sm:$0xf]
    %v60 = vld [vmem:[#allocation2 + $0x18] sm:$0xf]
    %v61 = vld [vmem:[#allocation2 + $0x1c] sm:$0xf]
    %v62 = vld [vmem:[#allocation2 + $0x20] sm:$0xf]
    %v63 = vld [vmem:[#allocation2 + $0x24] sm:$0xf]
    %v64 = vld [vmem:[#allocation2 + $0x28] sm:$0xf]
    %v65 = vld [vmem:[#allocation2 + $0x2c] sm:$0xf]
    %v66 = vld [vmem:[#allocation2 + $0x30] sm:$0xf]
    %v67 = vld [vmem:[#allocation2 + $0x34] sm:$0xf]
    %v68 = vld [vmem:[#allocation2 + $0x38] sm:$0xf]
    %v69 = vld [vmem:[#allocation2 + $0x3c] sm:$0xf]
    %v70 = vld [vmem:[%s2] sm:$0x1]
    %v72 = vperm.slane %v70, 0
    %v76 = vunpack.c.l.b16 %v52
    %v77 = vunpack.c.l.b16 %v53
    %v78 = vpack.c.b16 %v77, %v76
    %v96 = vunpack.c.l.b16 %v54
    %v97 = vunpack.c.l.b16 %v55
    %v98 = vunpack.c.l.b16 %v56
    %v99 = vunpack.c.l.b16 %v57
    %v100 = vunpack.c.l.b16 %v58
    %v101 = vunpack.c.l.b16 %v59
    %v102 = vunpack.c.l.b16 %v60
    %v103 = vunpack.c.l.b16 %v61
    %v104 = vunpack.c.l.b16 %v62
    %v105 = vunpack.c.l.b16 %v63
    %v106 = vunpack.c.l.b16 %v64
    %v107 = vunpack.c.l.b16 %v65
    %v108 = vunpack.c.l.b16 %v66
    %v109 = vunpack.c.l.b16 %v67
    %v110 = vunpack.c.l.b16 %v68
    %v111 = vunpack.c.l.b16 %v69
    %v112 = vpack.c.b16 %v97, %v96
    %v113 = vpack.c.b16 %v99, %v98
    %v114 = vpack.c.b16 %v101, %v100
    %v115 = vpack.c.b16 %v103, %v102
    %v116 = vpack.c.b16 %v105, %v104
    %v117 = vpack.c.b16 %v107, %v106
    %v118 = vpack.c.b16 %v109, %v108
    %v119 = vpack.c.b16 %v111, %v110
    %128 = vmatpush.bf16.msra.mxu0 %v119
    %129 = vmatpush.bf16.msra.mxu0 %v118
    %130 = vmatpush.bf16.msra.mxu0 %v117
    %131 = vmatpush.bf16.msra.mxu0 %v116
    %132 = vmatpush.bf16.msra.mxu0 %v115
    %133 = vmatpush.bf16.msra.mxu0 %v114
    %134 = vmatpush.bf16.msra.mxu0 %v113
    %135 = vmatpush.bf16.msra.mxu0 %v112
    %136 = vmatmul.bf16.gmra.mxu0 %v78
    %v137 = vpop.f32.mrf.mxu0
    %v138 = vadd.f32 %v72, %v137
    %v139 = vpop.f32.mrf.mxu0
    %v140 = vadd.f32 %v72, %v139
    %141 = vdwg.mxu0
    %v142 = vmax.f32 %v138, 0.0
    %v143 = vmax.f32 %v140, 0.0
    %v144 = vpack.c.bf16 %v143, %v142
    %v145 = vld [vmem:[#allocation4] sm:$0xf]
    %v146 = vld [vmem:[#allocation4 + $0x4] sm:$0xf]
    %v147 = vld [vmem:[#allocation4 + $0x8] sm:$0xf]
    %v148 = vld [vmem:[#allocation4 + $0xc] sm:$0xf]
    %v149 = vld [vmem:[#allocation4 + $0x10] sm:$0xf]
    %v150 = vld [vmem:[#allocation4 + $0x14] sm:$0xf]
    %v151 = vld [vmem:[#allocation4 + $0x18] sm:$0xf]
    %v152 = vld [vmem:[#allocation4 + $0x1c] sm:$0xf]
    %v153 = vld [vmem:[#allocation4 + $0x20] sm:$0xf]
    %v154 = vld [vmem:[#allocation4 + $0x24] sm:$0xf]
    %v155 = vld [vmem:[#allocation4 + $0x28] sm:$0xf]
    %v156 = vld [vmem:[#allocation4 + $0x2c] sm:$0xf]
    %v157 = vld [vmem:[#allocation4 + $0x30] sm:$0xf]
    %v158 = vld [vmem:[#allocation4 + $0x34] sm:$0xf]
    %v159 = vld [vmem:[#allocation4 + $0x38] sm:$0xf]
    %v160 = vld [vmem:[#allocation4 + $0x3c] sm:$0xf]
    %v161 = vld [vmem:[%s4] sm:$0x1]
    %v163 = vperm.slane %v161, 0
    %v181 = vunpack.c.l.b16 %v145
    %v182 = vunpack.c.l.b16 %v146
    %v183 = vunpack.c.l.b16 %v147
    %v184 = vunpack.c.l.b16 %v148
    %v185 = vunpack.c.l.b16 %v149
    %v186 = vunpack.c.l.b16 %v150
    %v187 = vunpack.c.l.b16 %v151
    %v188 = vunpack.c.l.b16 %v152
    %v189 = vunpack.c.l.b16 %v153
    %v190 = vunpack.c.l.b16 %v154
    %v191 = vunpack.c.l.b16 %v155
    %v192 = vunpack.c.l.b16 %v156
    %v193 = vunpack.c.l.b16 %v157
    %v194 = vunpack.c.l.b16 %v158
    %v195 = vunpack.c.l.b16 %v159
    %v196 = vunpack.c.l.b16 %v160
    %v197 = vpack.c.b16 %v182, %v181
    %v198 = vpack.c.b16 %v184, %v183
    %v199 = vpack.c.b16 %v186, %v185
    %v200 = vpack.c.b16 %v188, %v187
    %v201 = vpack.c.b16 %v190, %v189
    %v202 = vpack.c.b16 %v192, %v191
    %v203 = vpack.c.b16 %v194, %v193
    %v204 = vpack.c.b16 %v196, %v195
    %213 = vmatpush.bf16.msra.mxu0 %v204
    %214 = vmatpush.bf16.msra.mxu0 %v203
    %215 = vmatpush.bf16.msra.mxu0 %v202
    %216 = vmatpush.bf16.msra.mxu0 %v201
    %217 = vmatpush.bf16.msra.mxu0 %v200
    %218 = vmatpush.bf16.msra.mxu0 %v199
    %219 = vmatpush.bf16.msra.mxu0 %v198
    %220 = vmatpush.bf16.msra.mxu0 %v197
    %221 = vmatmul.bf16.gmra.mxu0 %v144
    %v222 = vpop.f32.mrf.mxu0
    %v223 = vadd.f32 %v163, %v222
    %v224 = vpop.f32.mrf.mxu0
    %v225 = vadd.f32 %v163, %v224
    %226 = vdwg.mxu0
    %227 = vst [vmem:[%s5] sm:$0xff] %v223
    %228 = vst [vmem:[%s5 + $0x8] sm:$0xff] %v225
    // Predicated region
    $region30: #{mlp_forward_padded.1} parent=1 // pred_check
      _
    $region31: #{mlp_forward_padded.1} parent=1 // pred_check_branch
      %230 = sbr.rel (0) target = $region33
    $region32: #{mlp_forward_padded.1} parent=1 // pred_region
      _
    $region33: #{mlp_forward_padded.1} parent=1 // pred_fallthru
      _
    // Predicated region
    $region34: #{mlp_forward_padded.1} parent=1 // pred_check
      _
    $region35: #{mlp_forward_padded.1} parent=1 // pred_check_branch
      %232 = sbr.rel (0) target = $region37
    $region36: #{mlp_forward_padded.1} parent=1 // pred_region
      _
    $region37: #{mlp_forward_padded.1} parent=1 // pred_fallthru
      _
    %233 = vsyncpa [#allocation3], 1
    %234 = vsyncpa [#allocation5], 1

</llo_original>
